<compile_context>
chip_gen: v5e
topology: v5e:2x2
jax: 0.10.0
libtpu: 0.0.40
codegen_flags: <defaults>
</compile_context>

<pallas_src>
import functools

import jax
import jax.numpy as jnp
from jax.experimental import pallas as pl
from jax.experimental.pallas import tpu as pltpu


def _round_up(x, m):
    return ((x + m - 1) // m) * m


def _mlp_kernel(x_ref, w1_ref, b1_ref, w2_ref, b2_ref, w3_ref, b3_ref, o_ref,
                *, compute_dtype):
    """Fused 3-layer MLP on one batch tile: (Linear+ReLU) x2 + Linear.

    Matmul operands are `compute_dtype` (bf16 by default, MXU-native),
    accumulation and bias add are f32.
    """
    x = x_ref[...].astype(compute_dtype)
    h = jnp.dot(x, w1_ref[...], preferred_element_type=jnp.float32) + b1_ref[...]
    h = jnp.maximum(h, 0.0).astype(compute_dtype)                 # ReLU
    h = jnp.dot(h, w2_ref[...], preferred_element_type=jnp.float32) + b2_ref[...]
    h = jnp.maximum(h, 0.0).astype(compute_dtype)                 # ReLU
    out = jnp.dot(h, w3_ref[...], preferred_element_type=jnp.float32) + b3_ref[...]
    o_ref[...] = out.astype(o_ref.dtype)


def _choose_tile(n, block_rows, min_steps=4):
    """Pick a batch tile that yields >= min_steps grid steps when possible.

    >= 2 steps lets v7x shard the "parallel" axis across both TensorCores and
    lets BlockSpec double-buffering overlap DMA-in / compute / DMA-out.
    """
    if n < 8:
        return n                                   # single full-extent block
    tm = _round_up(pl.cdiv(n, min_steps), 8)       # multiple of 8 (sublane)
    return max(8, min(tm, block_rows))


def mlp_pallas(x_flat, w1, b1, w2, b2, w3, b3, *,
               block_rows=1024,
               out_dtype=jnp.bfloat16,
               compute_dtype=jnp.bfloat16):
    """Run the fused MLP kernel on (N, in_dims) input; returns (N, out_dims).

    Weights may be zero-padded along the hidden dimension; results are
    unchanged.  bf16 output halves the dominant HBM writeback stream; pass
    out_dtype=jnp.float32 / compute_dtype=jnp.float32 for a full-precision run.
    """
    n, in_dims = x_flat.shape
    hid = w1.shape[1]
    out_dims = w3.shape[1]
    out_dtype = jnp.dtype(out_dtype)

    assert block_rows % 8 == 0, "block_rows must be a multiple of 8 (sublane)"
    tm = _choose_tile(n, block_rows)
    grid = (pl.cdiv(n, tm),)

    def resident(shape):
        # Same block index at every grid step -> stays VMEM-resident (no re-DMA).
        return pl.BlockSpec(shape, lambda i: (0, 0))

    flops = 2 * n * (in_dims * hid + hid * hid + hid * out_dims)
    bytes_accessed = (
        n * in_dims * x_flat.dtype.itemsize
        + n * out_dims * out_dtype.itemsize
        + sum(int(a.size) * a.dtype.itemsize for a in (w1, b1, w2, b2, w3, b3))
    )

    kernel = functools.partial(_mlp_kernel, compute_dtype=compute_dtype)

    return pl.pallas_call(
        kernel,
        out_shape=jax.ShapeDtypeStruct((n, out_dims), out_dtype),
        grid_spec=pltpu.PrefetchScalarGridSpec(
            num_scalar_prefetch=0,
            grid=grid,
            in_specs=[
                pl.BlockSpec((tm, in_dims), lambda i: (i, 0)),
                resident(w1.shape), resident(b1.shape),
                resident(w2.shape), resident(b2.shape),
                resident(w3.shape), resident(b3.shape),
            ],
            out_specs=pl.BlockSpec((tm, out_dims), lambda i: (i, 0)),
        ),
        compiler_params=pltpu.CompilerParams(
            # Batch tiles are fully independent -> megacore sharding (v7x: 2 TCs).
            dimension_semantics=("parallel",),
            # No vmem_limit_bytes override: footprint is tiny on all generations
            # and 64 MiB would be v7x's entire per-TC VMEM.
        ),
        cost_estimate=pl.CostEstimate(
            flops=flops, transcendentals=0, bytes_accessed=bytes_accessed),
    )(x_flat, w1, b1, w2, b2, w3, b3)


def _linear_init(key, fan_in, fan_out, dtype=jnp.float32):
    """PyTorch nn.Linear default init: U(-1/sqrt(fan_in), 1/sqrt(fan_in))."""
    kw, kb = jax.random.split(key)
    bound = 1.0 / jnp.sqrt(jnp.asarray(fan_in, dtype))
    w = jax.random.uniform(kw, (fan_in, fan_out), dtype, minval=-bound, maxval=bound)
    b = jax.random.uniform(kb, (1, fan_out), dtype, minval=-bound, maxval=bound)
    return w, b


def _pad_hidden(w1, b1, w2, b2, w3, hidden_pad):
    """Zero-pad hidden width for lane alignment (mathematically a no-op)."""
    hid = w1.shape[1]
    pad = hidden_pad - hid
    if pad <= 0:
        return w1, b1, w2, b2, w3
    w1p = jnp.pad(w1, ((0, 0), (0, pad)))
    b1p = jnp.pad(b1, ((0, 0), (0, pad)))
    w2p = jnp.pad(w2, ((0, pad), (0, pad)))
    b2p = jnp.pad(b2, ((0, 0), (0, pad)))
    w3p = jnp.pad(w3, ((0, pad), (0, 0)))
    return w1p, b1p, w2p, b2p, w3p


class MLPNetPallas:
    """Pallas equivalent of lie_vae MLPNet (deconv treated as identity).

    compute_dtype / out_dtype default to bf16 (MXU-native operands, halved
    HBM writeback); pass jnp.float32 for a bit-exact-to-fp32 path.
    """

    def __init__(self, degrees, deconv=None, in_dims=9, rep_copies=10,
                 layers=3, hidden_dims=50, key=None, block_rows=1024,
                 compute_dtype=jnp.bfloat16, out_dtype=jnp.bfloat16):
        assert layers == 3, "kernel is specialized to the default layers=3"
        matrix_dims = (degrees + 1) ** 2
        out_dims = matrix_dims * rep_copies
        if key is None:
            key = jax.random.PRNGKey(0)
        k1, k2, k3 = jax.random.split(key, 3)
        # Unpadded fp32 parameters (PyTorch-equivalent semantics / reference).
        self.w1, self.b1 = _linear_init(k1, in_dims, hidden_dims)
        self.w2, self.b2 = _linear_init(k2, hidden_dims, hidden_dims)
        self.w3, self.b3 = _linear_init(k3, hidden_dims, out_dims)
        # Lane-aligned (hidden padded to a multiple of 128) copies for the
        # kernel; matmul operands stored in compute_dtype, biases stay fp32.
        hidden_pad = _round_up(hidden_dims, 128)
        w1p, b1p, w2p, b2p, w3p = _pad_hidden(
            self.w1, self.b1, self.w2, self.b2, self.w3, hidden_pad)
        cd = jnp.dtype(compute_dtype)
        self._kw1, self._kw2, self._kw3 = (w1p.astype(cd), w2p.astype(cd),
                                           w3p.astype(cd))
        self._kb1, self._kb2, self._kb3 = b1p, b2p, self.b3
        self.compute_dtype = cd
        self.out_dtype = jnp.dtype(out_dtype)
        self.block_rows = block_rows
        self.deconv = deconv if deconv is not None else (lambda y: y)

    def __call__(self, x, content_data=None, *, block_rows=None):
        n = x.shape[0]
        x_flat = x.reshape(n, -1).astype(jnp.float32)
        y = mlp_pallas(
            x_flat,
            self._kw1, self._kb1, self._kw2, self._kb2, self._kw3, self._kb3,
            block_rows=self.block_rows if block_rows is None else block_rows,
            out_dtype=self.out_dtype,
            compute_dtype=self.compute_dtype)
        return self.deconv(y)


def _reference_forward(net, x):
    """Pure-JAX fp32 reference (unpadded weights) for correctness checking."""
    n = x.shape[0]
    h = x.reshape(n, -1).astype(jnp.float32)
    h = jnp.maximum(h @ net.w1 + net.b1, 0.0)
    h = jnp.maximum(h @ net.w2 + net.b2, 0.0)
    return net.deconv(h @ net.w3 + net.b3)


if __name__ == "__main__":
    key = jax.random.PRNGKey(0)
    k_param, k_x, k_x2 = jax.random.split(key, 3)

    # Module-consistent shapes: group element = 3x3 rotation matrix
    # (in_dims=9 after flatten), degrees=3 -> (3+1)^2 * 10 = 160 outputs.
    degrees = 3
    rep_copies = 10
    out_dims = (degrees + 1) ** 2 * rep_copies

    # Default (performance) configuration: bf16 MXU operands + bf16 output.
    net_bf16 = MLPNetPallas(degrees=degrees, in_dims=9, rep_copies=rep_copies,
                            layers=3, hidden_dims=50, key=k_param)
    # Full-precision configuration (same weights via same key) for a tight check.
    net_f32 = MLPNetPallas(degrees=degrees, in_dims=9, rep_copies=rep_copies,
                           layers=3, hidden_dims=50, key=k_param,
                           compute_dtype=jnp.float32, out_dtype=jnp.float32)

    # 1) Small batch, bf16 default path (single full-extent block).
    batch = 2
    x = jax.random.normal(k_x, (batch, 3, 3), dtype=jnp.float32)
    out = jax.block_until_ready(net_bf16(x))
    ref = _reference_forward(net_bf16, x)
    assert out.shape == (batch, out_dims), out.shape
    assert out.dtype == jnp.bfloat16, out.dtype
    assert jnp.allclose(out.astype(jnp.float32), ref, atol=5e-2, rtol=5e-2), \
        float(jnp.max(jnp.abs(out.astype(jnp.float32) - ref)))

    # 2) Multi-tile path with a partial last block, bf16 path
    #    (block_rows=128 -> tm=80, grid=(4,), last block = 60 rows).
    batch2 = 300
    x2 = jax.random.normal(k_x2, (batch2, 3, 3), dtype=jnp.float32)
    out2 = jax.block_until_ready(net_bf16(x2, block_rows=128))
    ref2 = _reference_forward(net_bf16, x2)
    assert out2.shape == (batch2, out_dims), out2.shape
    assert jnp.allclose(out2.astype(jnp.float32), ref2, atol=5e-2, rtol=5e-2), \
        float(jnp.max(jnp.abs(out2.astype(jnp.float32) - ref2)))

    # 3) Full-precision path, multi-tile: tight tolerance against fp32 reference.
    out3 = jax.block_until_ready(net_f32(x2, block_rows=128))
    ref3 = _reference_forward(net_f32, x2)
    assert out3.shape == (batch2, out_dims), out3.shape
    assert jnp.allclose(out3, ref3, atol=1e-4, rtol=1e-4), \
        float(jnp.max(jnp.abs(out3 - ref3)))

    print("KERNEL_OK")
</pallas_src>

<mosaic_0001>
module attributes {stable_mosaic.version = 11 : i64} {
  func.func @_mlp_kernel(%arg0: i32, %arg1: memref<2x9xf32, #tpu.memory_space<vmem>>, %arg2: memref<9x128xbf16, #tpu.memory_space<vmem>>, %arg3: memref<1x128xf32, #tpu.memory_space<vmem>>, %arg4: memref<128x128xbf16, #tpu.memory_space<vmem>>, %arg5: memref<1x128xf32, #tpu.memory_space<vmem>>, %arg6: memref<128x160xbf16, #tpu.memory_space<vmem>>, %arg7: memref<1x160xf32, #tpu.memory_space<vmem>>, %arg8: memref<2x160xbf16, #tpu.memory_space<vmem>>) attributes {dimension_semantics = [#tpu.dimension_semantics<parallel>], iteration_bounds = array<i64: 1>, scalar_prefetch = 0 : i64, scratch_operands = 0 : i64, tpu.core_type = #tpu.core_type<tc>, window_params = [{transform_indices = @transform_0, window_bounds = array<i64: 2, 9>}, {pipeline_mode = #tpu.pipeline_mode<synchronous>, transform_indices = @transform_1, window_bounds = array<i64: 9, 128>}, {pipeline_mode = #tpu.pipeline_mode<synchronous>, transform_indices = @transform_2, window_bounds = array<i64: 1, 128>}, {pipeline_mode = #tpu.pipeline_mode<synchronous>, transform_indices = @transform_3, window_bounds = array<i64: 128, 128>}, {pipeline_mode = #tpu.pipeline_mode<synchronous>, transform_indices = @transform_4, window_bounds = array<i64: 1, 128>}, {pipeline_mode = #tpu.pipeline_mode<synchronous>, transform_indices = @transform_5, window_bounds = array<i64: 128, 160>}, {pipeline_mode = #tpu.pipeline_mode<synchronous>, transform_indices = @transform_6, window_bounds = array<i64: 1, 160>}, {transform_indices = @transform_7, window_bounds = array<i64: 2, 160>}]} {
    %c0 = arith.constant 0 : index
    %c0_0 = arith.constant 0 : index
    %0 = vector.load %arg1[%c0, %c0_0] : memref<2x9xf32, #tpu.memory_space<vmem>>, vector<2x9xf32>
    %1 = arith.truncf %0 : vector<2x9xf32> to vector<2x9xbf16>
    %c0_1 = arith.constant 0 : index
    %c0_2 = arith.constant 0 : index
    %2 = vector.load %arg2[%c0_1, %c0_2] : memref<9x128xbf16, #tpu.memory_space<vmem>>, vector<9x128xbf16>
    %cst = arith.constant dense<0.000000e+00> : vector<2x128xf32>
    %3 = tpu.matmul %1, %2, %cst {dimension_numbers = #tpu.dot_dimension_numbers<[1], [0], [0], [1], [0, 0, 1, 1], [], []>} : vector<2x9xbf16>, vector<9x128xbf16>, vector<2x128xf32> -> vector<2x128xf32>
    %c0_3 = arith.constant 0 : index
    %c0_4 = arith.constant 0 : index
    %4 = vector.load %arg3[%c0_3, %c0_4] : memref<1x128xf32, #tpu.memory_space<vmem>>, vector<1x128xf32>
    %5 = vector.broadcast %4 : vector<1x128xf32> to vector<2x128xf32>
    %6 = arith.addf %3, %5 : vector<2x128xf32>
    %cst_5 = arith.constant 0.000000e+00 : f32
    %7 = vector.broadcast %cst_5 : f32 to vector<2x128xf32>
    %8 = arith.maximumf %6, %7 : vector<2x128xf32>
    %9 = arith.truncf %8 : vector<2x128xf32> to vector<2x128xbf16>
    %c0_6 = arith.constant 0 : index
    %c0_7 = arith.constant 0 : index
    %10 = vector.load %arg4[%c0_6, %c0_7] : memref<128x128xbf16, #tpu.memory_space<vmem>>, vector<128x128xbf16>
    %cst_8 = arith.constant dense<0.000000e+00> : vector<2x128xf32>
    %11 = tpu.matmul %9, %10, %cst_8 {dimension_numbers = #tpu.dot_dimension_numbers<[1], [0], [0], [1], [0, 0, 1, 1], [], []>} : vector<2x128xbf16>, vector<128x128xbf16>, vector<2x128xf32> -> vector<2x128xf32>
    %c0_9 = arith.constant 0 : index
    %c0_10 = arith.constant 0 : index
    %12 = vector.load %arg5[%c0_9, %c0_10] : memref<1x128xf32, #tpu.memory_space<vmem>>, vector<1x128xf32>
    %13 = vector.broadcast %12 : vector<1x128xf32> to vector<2x128xf32>
    %14 = arith.addf %11, %13 : vector<2x128xf32>
    %cst_11 = arith.constant 0.000000e+00 : f32
    %15 = vector.broadcast %cst_11 : f32 to vector<2x128xf32>
    %16 = arith.maximumf %14, %15 : vector<2x128xf32>
    %17 = arith.truncf %16 : vector<2x128xf32> to vector<2x128xbf16>
    %c0_12 = arith.constant 0 : index
    %c0_13 = arith.constant 0 : index
    %18 = vector.load %arg6[%c0_12, %c0_13] : memref<128x160xbf16, #tpu.memory_space<vmem>>, vector<128x160xbf16>
    %cst_14 = arith.constant dense<0.000000e+00> : vector<2x160xf32>
    %19 = tpu.matmul %17, %18, %cst_14 {dimension_numbers = #tpu.dot_dimension_numbers<[1], [0], [0], [1], [0, 0, 1, 1], [], []>} : vector<2x128xbf16>, vector<128x160xbf16>, vector<2x160xf32> -> vector<2x160xf32>
    %c0_15 = arith.constant 0 : index
    %c0_16 = arith.constant 0 : index
    %20 = vector.load %arg7[%c0_15, %c0_16] : memref<1x160xf32, #tpu.memory_space<vmem>>, vector<1x160xf32>
    %21 = vector.broadcast %20 : vector<1x160xf32> to vector<2x160xf32>
    %22 = arith.addf %19, %21 : vector<2x160xf32>
    %23 = arith.truncf %22 : vector<2x160xf32> to vector<2x160xbf16>
    %c0_17 = arith.constant 0 : index
    %c0_18 = arith.constant 0 : index
    %24 = vector.load %arg8[%c0_17, %c0_18] : memref<2x160xbf16, #tpu.memory_space<vmem>>, vector<2x160xbf16>
    tpu.vector_store %arg8[%c0_17, %c0_18], %23 {strides = array<i32>} : memref<2x160xbf16, #tpu.memory_space<vmem>>, vector<2x160xbf16>,
    return
  }
  func.func @transform_0(%arg0: i32) -> (i32, i32) {
    %c0_i32 = arith.constant 0 : i32
    %c0_i32_0 = arith.constant 0 : i32
    return %arg0, %c0_i32 : i32, i32
  }
  func.func @transform_1(%arg0: i32) -> (i32, i32) {
    %c0_i32 = arith.constant 0 : i32
    %c0_i32_0 = arith.constant 0 : i32
    %c0_i32_1 = arith.constant 0 : i32
    return %c0_i32, %c0_i32_0 : i32, i32
  }
  func.func @transform_2(%arg0: i32) -> (i32, i32) {
    %c0_i32 = arith.constant 0 : i32
    %c0_i32_0 = arith.constant 0 : i32
    %c0_i32_1 = arith.constant 0 : i32
    return %c0_i32, %c0_i32_0 : i32, i32
  }
  func.func @transform_3(%arg0: i32) -> (i32, i32) {
    %c0_i32 = arith.constant 0 : i32
    %c0_i32_0 = arith.constant 0 : i32
    %c0_i32_1 = arith.constant 0 : i32
    return %c0_i32, %c0_i32_0 : i32, i32
  }
  func.func @transform_4(%arg0: i32) -> (i32, i32) {
    %c0_i32 = arith.constant 0 : i32
    %c0_i32_0 = arith.constant 0 : i32
    %c0_i32_1 = arith.constant 0 : i32
    return %c0_i32, %c0_i32_0 : i32, i32
  }
  func.func @transform_5(%arg0: i32) -> (i32, i32) {
    %c0_i32 = arith.constant 0 : i32
    %c0_i32_0 = arith.constant 0 : i32
    %c0_i32_1 = arith.constant 0 : i32
    return %c0_i32, %c0_i32_0 : i32, i32
  }
  func.func @transform_6(%arg0: i32) -> (i32, i32) {
    %c0_i32 = arith.constant 0 : i32
    %c0_i32_0 = arith.constant 0 : i32
    %c0_i32_1 = arith.constant 0 : i32
    return %c0_i32, %c0_i32_0 : i32, i32
  }
  func.func @transform_7(%arg0: i32) -> (i32, i32) {
    %c0_i32 = arith.constant 0 : i32
    %c0_i32_0 = arith.constant 0 : i32
    return %arg0, %c0_i32 : i32, i32
  }
}

</mosaic_0001>

<llo_original>
// kernel: tpu_custom_call.1
$region0: #{tpu_custom_call.1}
  #allocation0 [shape = 'u32[]', space=smem, size = 0x4, offset = 0x4, fixed_abs, tag = 'smem constant byte address 0x4 - core index']
  #allocation1 [shape = 'u32[72,128]{1,0:T(1,128)}', space=vmem, size = 0x9000, scoped, tag = 'internal scratch']
  %s0 = inlined_call_operand.vmem [shape: f32[2,9], index: 0, kind: input, shape index: {}]
  %s1 = inlined_call_operand.vmem [shape: bf16[9,128], index: 1, kind: input, shape index: {}]
  %s2 = inlined_call_operand.vmem [shape: f32[1,128], index: 2, kind: input, shape index: {}]
  %s3 = inlined_call_operand.vmem [shape: bf16[128,128], index: 3, kind: input, shape index: {}]
  %s4 = inlined_call_operand.vmem [shape: f32[1,128], index: 4, kind: input, shape index: {}]
  %s5 = inlined_call_operand.vmem [shape: bf16[128,160], index: 5, kind: input, shape index: {}]
  %s6 = inlined_call_operand.vmem [shape: f32[1,160], index: 6, kind: input, shape index: {}]
  %s7 = inlined_call_operand.hbm [shape: bf16[2,160], index: 7, kind: output, shape index: {}]
  %s8 = sld [smem:[#allocation0]]
  $region38: #{tpu_custom_call.1} parent=0
    _
  %s10 = ssub.s32 1, %s8
  %s11 = scalar_select 0, %s10, %s8
  $region1: #{tpu_custom_call.1} parent=0
    #allocation2 [shape = 'u8[1024]{0}', space=vmem, size = 0x400, scoped, tag = 'output window, operand 0, single buffered']
    #allocation3 [shape = 's32[1]{0}', space=sflag, size = 0x4, scoped, tag = 'scoped memory for tpu_custom_call.1']
    %12 = vsyncpa [#allocation3], 0
    // Predicated region
    $region2: #{tpu_custom_call.1} parent=1 // pred_check
      _
    $region3: #{tpu_custom_call.1} parent=1 // pred_check_branch
      %14 = sbr.rel (0) target = $region5
    $region4: #{tpu_custom_call.1} parent=1 // pred_region
      _
    $region5: #{tpu_custom_call.1} parent=1 // pred_fallthru
      _
    // Predicated region
    $region6: #{tpu_custom_call.1} parent=1 // pred_check
      _
    $region7: #{tpu_custom_call.1} parent=1 // pred_check_branch
      %16 = sbr.rel (0) target = $region9
    $region8: #{tpu_custom_call.1} parent=1 // pred_region
      _
    $region9: #{tpu_custom_call.1} parent=1 // pred_fallthru
      _
    // Predicated region
    $region10: #{tpu_custom_call.1} parent=1 // pred_check
      _
    $region11: #{tpu_custom_call.1} parent=1 // pred_check_branch
      %18 = sbr.rel (0) target = $region13
    $region12: #{tpu_custom_call.1} parent=1 // pred_region
      _
    $region13: #{tpu_custom_call.1} parent=1 // pred_fallthru
      _
    // Predicated region
    $region14: #{tpu_custom_call.1} parent=1 // pred_check
      _
    $region15: #{tpu_custom_call.1} parent=1 // pred_check_branch
      %20 = sbr.rel (0) target = $region17
    $region16: #{tpu_custom_call.1} parent=1 // pred_region
      _
    $region17: #{tpu_custom_call.1} parent=1 // pred_fallthru
      _
    // Predicated region
    $region18: #{tpu_custom_call.1} parent=1 // pred_check
      _
    $region19: #{tpu_custom_call.1} parent=1 // pred_check_branch
      %22 = sbr.rel (0) target = $region21
    $region20: #{tpu_custom_call.1} parent=1 // pred_region
      _
    $region21: #{tpu_custom_call.1} parent=1 // pred_fallthru
      _
    // Predicated region
    $region22: #{tpu_custom_call.1} parent=1 // pred_check
      _
    $region23: #{tpu_custom_call.1} parent=1 // pred_check_branch
      %24 = sbr.rel (0) target = $region25
    $region24: #{tpu_custom_call.1} parent=1 // pred_region
      _
    $region25: #{tpu_custom_call.1} parent=1 // pred_fallthru
      _
    // Predicated region
    $region26: #{tpu_custom_call.1} parent=1 // pred_check
      _
    $region27: #{tpu_custom_call.1} parent=1 // pred_check_branch
      %26 = sbr.rel (0) target = $region29
    $region28: #{tpu_custom_call.1} parent=1 // pred_region
      _
    $region29: #{tpu_custom_call.1} parent=1 // pred_fallthru
      _
    %v28 = vld [vmem:[%s0] sm:$0x3]
    %v29 = vpack.c.bf16 %v28, %v28
    %v30 = vld [vmem:[%s1] sm:$0xf]
    %v31 = vld [vmem:[%s1 + $0x4] sm:$0x1]
    %v32 = vld [vmem:[%s2] sm:$0x1]
    %v34 = vperm.slane %v32, 0
    %v38 = vunpack.c.l.b16 %v30
    %v39 = vunpack.c.l.b16 %v31
    %v40 = vpack.c.b16 %v39, %v38
    %vm41 = vcmask 72704
    %v43 = vsel %vm41, %v29, 0
    %vm45 = vcmask 1043456
    %vm46 = vcmask 1044480
    %v47 = vsel %vm45, 4294967295, 65535
    %v48 = vsel %vm46, %v47, 0
    %v50 = vand.u32 %v40, %v48
    %52 = vmatpush.bf16.msra.mxu0 0
    %53 = vmatpush.bf16.msra.mxu0 0
    %54 = vmatpush.bf16.msra.mxu0 0
    %55 = vmatpush.bf16.msra.mxu0 0
    %56 = vmatpush.bf16.msra.mxu0 0
    %57 = vmatpush.bf16.msra.mxu0 0
    %58 = vmatpush.bf16.msra.mxu0 0
    %59 = vmatpush.bf16.msra.mxu0 %v50
    %60 = vmatmul.bf16.gmra.mxu0 %v43
    %v61 = vpop.f32.mrf.mxu0
    %v62 = vadd.f32 %v34, %v61
    %v63 = vpop.f32.mrf.mxu0
    %64 = vdwg.mxu0
    %v65 = vmax.f32 %v62, 0.0
    %v66 = vpack.c.bf16 %v65, %v65
    %v67 = vld [vmem:[%s3] sm:$0xf]
    %v68 = vld [vmem:[%s3 + $0x4] sm:$0xf]
    %v69 = vld [vmem:[%s3 + $0x8] sm:$0xf]
    %v70 = vld [vmem:[%s3 + $0xc] sm:$0xf]
    %v71 = vld [vmem:[%s3 + $0x10] sm:$0xf]
    %v72 = vld [vmem:[%s3 + $0x14] sm:$0xf]
    %v73 = vld [vmem:[%s3 + $0x18] sm:$0xf]
    %v74 = vld [vmem:[%s3 + $0x1c] sm:$0xf]
    %v75 = vld [vmem:[%s3 + $0x20] sm:$0xf]
    %v76 = vld [vmem:[%s3 + $0x24] sm:$0xf]
    %v77 = vld [vmem:[%s3 + $0x28] sm:$0xf]
    %v78 = vld [vmem:[%s3 + $0x2c] sm:$0xf]
    %v79 = vld [vmem:[%s3 + $0x30] sm:$0xf]
    %v80 = vld [vmem:[%s3 + $0x34] sm:$0xf]
    %v81 = vld [vmem:[%s3 + $0x38] sm:$0xf]
    %v82 = vld [vmem:[%s3 + $0x3c] sm:$0xf]
    %v83 = vld [vmem:[%s4] sm:$0x1]
    %v85 = vperm.slane %v83, 0
    %v103 = vunpack.c.l.b16 %v67
    %v104 = vunpack.c.l.b16 %v68
    %v105 = vunpack.c.l.b16 %v69
    %v106 = vunpack.c.l.b16 %v70
    %v107 = vunpack.c.l.b16 %v71
    %v108 = vunpack.c.l.b16 %v72
    %v109 = vunpack.c.l.b16 %v73
    %v110 = vunpack.c.l.b16 %v74
    %v111 = vunpack.c.l.b16 %v75
    %v112 = vunpack.c.l.b16 %v76
    %v113 = vunpack.c.l.b16 %v77
    %v114 = vunpack.c.l.b16 %v78
    %v115 = vunpack.c.l.b16 %v79
    %v116 = vunpack.c.l.b16 %v80
    %v117 = vunpack.c.l.b16 %v81
    %v118 = vunpack.c.l.b16 %v82
    %v119 = vpack.c.b16 %v104, %v103
    %v120 = vpack.c.b16 %v106, %v105
    %v121 = vpack.c.b16 %v108, %v107
    %v122 = vpack.c.b16 %v110, %v109
    %v123 = vpack.c.b16 %v112, %v111
    %v124 = vpack.c.b16 %v114, %v113
    %v125 = vpack.c.b16 %v116, %v115
    %v126 = vpack.c.b16 %v118, %v117
    %135 = vmatpush.bf16.msra.mxu0 %v126
    %136 = vmatpush.bf16.msra.mxu0 %v125
    %137 = vmatpush.bf16.msra.mxu0 %v124
    %138 = vmatpush.bf16.msra.mxu0 %v123
    %139 = vmatpush.bf16.msra.mxu0 %v122
    %140 = vmatpush.bf16.msra.mxu0 %v121
    %141 = vmatpush.bf16.msra.mxu0 %v120
    %142 = vmatpush.bf16.msra.mxu0 %v119
    %143 = vmatmul.bf16.gmra.mxu0 %v66
    %v144 = vpop.f32.mrf.mxu0
    %v145 = vadd.f32 %v85, %v144
    %v146 = vpop.f32.mrf.mxu0
    %147 = vdwg.mxu0
    %v148 = vmax.f32 %v145, 0.0
    %v149 = vpack.c.bf16 %v148, %v148
    %v150 = vld [vmem:[%s5] sm:$0xff]
    %v151 = vld [vmem:[%s5 + $0x8] sm:$0xff]
    %v152 = vld [vmem:[%s5 + $0x10] sm:$0xff]
    %v153 = vld [vmem:[%s5 + $0x18] sm:$0xff]
    %v154 = vld [vmem:[%s5 + $0x20] sm:$0xff]
    %v155 = vld [vmem:[%s5 + $0x28] sm:$0xff]
    %v156 = vld [vmem:[%s5 + $0x30] sm:$0xff]
    %v157 = vld [vmem:[%s5 + $0x38] sm:$0xff]
    %v158 = vld [vmem:[%s5 + $0x40] sm:$0xff]
    %v159 = vld [vmem:[%s5 + $0x48] sm:$0xff]
    %v160 = vld [vmem:[%s5 + $0x50] sm:$0xff]
    %v161 = vld [vmem:[%s5 + $0x58] sm:$0xff]
    %v162 = vld [vmem:[%s5 + $0x60] sm:$0xff]
    %v163 = vld [vmem:[%s5 + $0x68] sm:$0xff]
    %v164 = vld [vmem:[%s5 + $0x70] sm:$0xff]
    %v165 = vld [vmem:[%s5 + $0x78] sm:$0xff]
    %v166 = vld [vmem:[%s6] sm:$0x3]
    %v168 = vperm.slane %v166, 0
    %v169 = vperm.slane %v166, 1
    %v188 = vunpack.c.l.b16 %v150
    %v189 = vunpack.c.h.b16 %v150
    %v190 = vunpack.c.l.b16 %v151
    %v191 = vunpack.c.h.b16 %v151
    %v192 = vunpack.c.l.b16 %v152
    %v193 = vunpack.c.h.b16 %v152
    %v194 = vunpack.c.l.b16 %v153
    %v195 = vunpack.c.h.b16 %v153
    %v196 = vunpack.c.l.b16 %v154
    %v197 = vunpack.c.h.b16 %v154
    %v198 = vunpack.c.l.b16 %v155
    %v199 = vunpack.c.h.b16 %v155
    %v200 = vunpack.c.l.b16 %v156
    %v201 = vunpack.c.h.b16 %v156
    %v202 = vunpack.c.l.b16 %v157
    %v203 = vunpack.c.h.b16 %v157
    %v204 = vunpack.c.l.b16 %v158
    %v205 = vunpack.c.h.b16 %v158
    %v206 = vunpack.c.l.b16 %v159
    %v207 = vunpack.c.h.b16 %v159
    %v208 = vunpack.c.l.b16 %v160
    %v209 = vunpack.c.h.b16 %v160
    %v210 = vunpack.c.l.b16 %v161
    %v211 = vunpack.c.h.b16 %v161
    %v212 = vunpack.c.l.b16 %v162
    %v213 = vunpack.c.h.b16 %v162
    %v214 = vunpack.c.l.b16 %v163
    %v215 = vunpack.c.h.b16 %v163
    %v216 = vunpack.c.l.b16 %v164
    %v217 = vunpack.c.h.b16 %v164
    %v218 = vunpack.c.l.b16 %v165
    %v219 = vunpack.c.h.b16 %v165
    %v220 = vpack.c.b16 %v190, %v188
    %v221 = vpack.c.b16 %v191, %v189
    %v222 = vpack.c.b16 %v194, %v192
    %v223 = vpack.c.b16 %v195, %v193
    %v224 = vpack.c.b16 %v198, %v196
    %v225 = vpack.c.b16 %v199, %v197
    %v226 = vpack.c.b16 %v202, %v200
    %v227 = vpack.c.b16 %v203, %v201
    %v228 = vpack.c.b16 %v206, %v204
    %v229 = vpack.c.b16 %v207, %v205
    %v230 = vpack.c.b16 %v210, %v208
    %v231 = vpack.c.b16 %v211, %v209
    %v232 = vpack.c.b16 %v214, %v212
    %v233 = vpack.c.b16 %v215, %v213
    %v234 = vpack.c.b16 %v218, %v216
    %v235 = vpack.c.b16 %v219, %v217
    %252 = vmatpush.bf16.msra.mxu0 %v234
    %253 = vmatpush.bf16.msra.mxu0 %v232
    %254 = vmatpush.bf16.msra.mxu0 %v230
    %255 = vmatpush.bf16.msra.mxu0 %v228
    %256 = vmatpush.bf16.msra.mxu0 %v226
    %257 = vmatpush.bf16.msra.mxu0 %v224
    %258 = vmatpush.bf16.msra.mxu0 %v222
    %259 = vmatpush.bf16.msra.mxu0 %v220
    %260 = vmatmul.bf16.gmra.mxu0 %v149
    %v261 = vpop.f32.mrf.mxu0
    %v262 = vadd.f32 %v168, %v261
    %v263 = vpop.f32.mrf.mxu0
    %264 = vdwg.mxu0
    %265 = vmatpush.bf16.msra.mxu0 %v235
    %266 = vmatpush.bf16.msra.mxu0 %v233
    %267 = vmatpush.bf16.msra.mxu0 %v231
    %268 = vmatpush.bf16.msra.mxu0 %v229
    %269 = vmatpush.bf16.msra.mxu0 %v227
    %270 = vmatpush.bf16.msra.mxu0 %v225
    %271 = vmatpush.bf16.msra.mxu0 %v223
    %272 = vmatpush.bf16.msra.mxu0 %v221
    %273 = vmatmul.bf16.gmra.mxu0 %v149
    %v274 = vpop.f32.mrf.mxu0
    %v275 = vadd.f32 %v169, %v274
    %v276 = vpop.f32.mrf.mxu0
    %277 = vdwg.mxu0
    %v278 = vpack.c.bf16 %v275, %v262
    %v280 = vrot.slane %v278, 3
    %vm281 = vcmask 1040384
    %v284 = vsel %vm281, %v278, %v280
    %vm286 = vcmask 254977
    %vm287 = vmor %vm286, %vm281
    %288 = vst.msk [vmem:[#allocation2] sm:$0x3] %vm287, %v284
    // Predicated region
    $region30: #{tpu_custom_call.1} parent=1 // pred_check
      _
    $region31: #{tpu_custom_call.1} parent=1 // pred_check_branch
      %290 = sbr.rel (0) target = $region33
    $region32: #{tpu_custom_call.1} parent=1 // pred_region
      %292 = vsyncadd [#allocation3], 0
      %s294 = sshll.u32 [#allocation2], 4
      %s295 = int_to_ptr.vmem [resolvable:$true] %s294
      %s296 = sshll.u32 %s7, 4
      %s297 = int_to_ptr.hbm [resolvable:$true] %s296
      %299 = dma.vmem_to_hbm [thread:$0]  %s295, 32, %s297, [#allocation3]
    $region33: #{tpu_custom_call.1} parent=1 // pred_fallthru
      _
    // Predicated region
    $region34: #{tpu_custom_call.1} parent=1 // pred_check
      _
    $region35: #{tpu_custom_call.1} parent=1 // pred_check_branch
      %301 = sbr.rel (0) target = $region37
    $region36: #{tpu_custom_call.1} parent=1 // pred_region
      %303 = dma.done [#allocation3], 32
    $region37: #{tpu_custom_call.1} parent=1 // pred_fallthru
      _
    %304 = vsyncpa [#allocation3], 1

</llo_original>
